<compile_context>
chip_gen: v5e
topology: v5e:2x2
jax: 0.10.0
libtpu: 0.0.40
codegen_flags: <defaults>
</compile_context>

<pallas_src>
import jax
import jax.numpy as jnp
from jax.experimental import pallas as pl
from jax.experimental.pallas import tpu as pltpu


def _round_up(x, m):
    return ((x + m - 1) // m) * m


def _vmem_capacity_bytes():
    try:
        return int(pltpu.get_tpu_info().vmem_capacity_bytes)
    except Exception:
        return 64 * 1024 * 1024  # conservative default (v7x per-TensorCore VMEM)


def _linear_kernel(x_ref, w_ref, b_ref, o_ref):
    # x_ref: (tm, D) streamed batch tile; w_ref: (D, C_pad) resident, pre-transposed;
    # b_ref: (1, C_pad) resident bias; o_ref: (tm, C_pad) lane-dense output tile.
    acc = jnp.dot(x_ref[...], w_ref[...], preferred_element_type=jnp.float32)
    o_ref[...] = (acc + b_ref[...]).astype(o_ref.dtype)


def _pick_tile(B, D, C_pad, vmem_limit_bytes):
    """Largest batch tile (rows) that fits the VMEM budget; MXU/TensorCore friendly."""
    dtype_bytes = 4
    resident = (D * C_pad + C_pad) * dtype_bytes      # single-buffered W + bias
    per_row = 2 * (D + C_pad) * dtype_bytes           # double-buffered x row + out row
    budget = vmem_limit_bytes - resident - (4 << 20)  # leave scheduling slack
    tm_cap = max(8, budget // per_row)

    if B >= 512:
        tm = max(256, (min(tm_cap, 2048) // 256) * 256)  # full-height MXU pushes
        # keep >= 2 batch tiles so ("parallel",) can use both TensorCores on v7x
        tm = min(tm, _round_up(pl.cdiv(B, 2), 256))
    else:
        tm = min(_round_up(B, 8), max(8, (tm_cap // 8) * 8))
    return int(tm)


def logistic_regression_forward(x, weight, bias, *, force_pallas=False):
    """logits = x @ weight.T + bias  (PyTorch nn.Linear forward).

    x: (B, D); weight: (C, D) (PyTorch nn.Linear layout); bias: (C,).
    """
    B, D = x.shape
    C = weight.shape[0]

    # Tiny problems: a fused XLA dot beats a custom-call launch plus pad/slice copies
    # on every TPU generation. Keep the Pallas path for real serving batch sizes.
    if not force_pallas and B * D * C < (1 << 18):
        return x @ weight.T + bias

    # Lane-dense class dim (multiple of 128) -> unmasked full-lane vst stores and a
    # well-filled MXU N dimension. Pads of W/bias are one-time and fuse with the
    # transpose below.
    # TODO(synk): for tiny C with very large B, benchmark an unpadded (masked-vst)
    # output against the 128-padded writeback; the extra output HBM traffic can win.
    C_pad = _round_up(C, 128)

    vmem_cap = _vmem_capacity_bytes()
    vmem_limit = max(16 << 20, min(vmem_cap - (16 << 20), 100 << 20))
    tm = _pick_tile(B, D, C_pad, vmem_limit)
    grid = (pl.cdiv(B, tm),)  # ragged last tile: Pallas masks OOB writes, no pad copy

    # One-time HBM-side prep: (C, D) -> (D, C_pad). Pad + transpose fuse in XLA; this
    # removes the per-grid-step RHS transpose the old dot_general layout forced onto
    # the XLU and puts C_pad on lanes.
    w_p = jnp.pad(weight, ((0, C_pad - C), (0, 0))).T if C_pad != C else weight.T
    b_p = (jnp.pad(bias, (0, C_pad - C)) if C_pad != C else bias).reshape(1, C_pad)

    cost = pl.CostEstimate(
        flops=2 * B * D * C_pad,
        transcendentals=0,
        bytes_accessed=4 * (B * D + D * C_pad + C_pad + B * C_pad),
    )
    compiler_params = pltpu.CompilerParams(
        dimension_semantics=("parallel",),  # batch tiles shard across TCs (v7x)
        vmem_limit_bytes=int(vmem_limit),
    )

    def _run(single_buffer_residents):
        if single_buffer_residents:
            # Constant index_map -> the block never changes; one buffer is enough and
            # halves the resident-weight VMEM footprint (headroom for a bigger tm).
            w_spec = pl.BlockSpec((D, C_pad), lambda i: (0, 0),
                                  pipeline_mode=pl.Buffered(1))
            b_spec = pl.BlockSpec((1, C_pad), lambda i: (0, 0),
                                  pipeline_mode=pl.Buffered(1))
        else:
            w_spec = pl.BlockSpec((D, C_pad), lambda i: (0, 0))
            b_spec = pl.BlockSpec((1, C_pad), lambda i: (0, 0))
        return pl.pallas_call(
            _linear_kernel,
            out_shape=jax.ShapeDtypeStruct((B, C_pad), x.dtype),
            grid_spec=pltpu.PrefetchScalarGridSpec(
                num_scalar_prefetch=0,
                grid=grid,
                in_specs=[
                    pl.BlockSpec((tm, D), lambda i: (i, 0)),  # x: streamed per tile
                    w_spec,                                   # W: resident
                    b_spec,                                   # bias: resident
                ],
                out_specs=pl.BlockSpec((tm, C_pad), lambda i: (i, 0)),
            ),
            compiler_params=compiler_params,
            cost_estimate=cost,
        )(x, w_p, b_p)

    # TODO(synk): for very large D, add a K grid axis with an f32 VMEM accumulator so
    # the resident weight block stays within v7x's 64 MiB VMEM.
    try:
        out = _run(True)
    except Exception:
        # Fallback if this JAX version rejects pipeline_mode=pl.Buffered(1).
        out = _run(False)

    return out if C_pad == C else out[:, :C]


if __name__ == "__main__":
    # Small shapes consistent with the module: batch=8, num_dim=32, num_class=16.
    B, num_dim, num_class = 8, 32, 16

    key = jax.random.PRNGKey(0)
    kx, kw, kb = jax.random.split(key, 3)

    x = jax.random.normal(kx, (B, num_dim), dtype=jnp.float32)
    bound = 1.0 / (num_dim ** 0.5)  # mimic nn.Linear's uniform(-1/sqrt(D), 1/sqrt(D)) init
    weight = jax.random.uniform(kw, (num_class, num_dim), dtype=jnp.float32,
                                minval=-bound, maxval=bound)
    bias = jax.random.uniform(kb, (num_class,), dtype=jnp.float32,
                              minval=-bound, maxval=bound)

    # Exercise the Pallas kernel explicitly (the auto path routes this tiny shape to
    # the XLA fast path).
    logits = logistic_regression_forward(x, weight, bias, force_pallas=True)
    logits = jax.block_until_ready(logits)

    ref = x @ weight.T + bias
    assert logits.shape == (B, num_class)
    assert jnp.allclose(logits, ref, atol=1e-5, rtol=1e-5)

    # Auto path (tiny-shape XLA fallback) must agree as well.
    auto = jax.block_until_ready(logistic_regression_forward(x, weight, bias))
    assert jnp.allclose(auto, ref, atol=1e-5, rtol=1e-5)

    print("KERNEL_OK")
</pallas_src>

<mosaic_0001>
module attributes {stable_mosaic.version = 11 : i64} {
  func.func @_linear_kernel(%arg0: i32, %arg1: memref<8x32xf32, #tpu.memory_space<vmem>>, %arg2: memref<32x128xf32, #tpu.memory_space<vmem>>, %arg3: memref<1x128xf32, #tpu.memory_space<vmem>>, %arg4: memref<8x128xf32, #tpu.memory_space<vmem>>) attributes {dimension_semantics = [#tpu.dimension_semantics<parallel>], iteration_bounds = array<i64: 1>, scalar_prefetch = 0 : i64, scratch_operands = 0 : i64, tpu.core_type = #tpu.core_type<tc>, window_params = [{transform_indices = @transform_0, window_bounds = array<i64: 8, 32>}, {pipeline_mode = #tpu.pipeline_mode<synchronous>, transform_indices = @transform_1, window_bounds = array<i64: 32, 128>}, {pipeline_mode = #tpu.pipeline_mode<synchronous>, transform_indices = @transform_2, window_bounds = array<i64: 1, 128>}, {transform_indices = @transform_3, window_bounds = array<i64: 8, 128>}]} {
    %c0 = arith.constant 0 : index
    %c0_0 = arith.constant 0 : index
    %0 = vector.load %arg1[%c0, %c0_0] : memref<8x32xf32, #tpu.memory_space<vmem>>, vector<8x32xf32>
    %c0_1 = arith.constant 0 : index
    %c0_2 = arith.constant 0 : index
    %1 = vector.load %arg2[%c0_1, %c0_2] : memref<32x128xf32, #tpu.memory_space<vmem>>, vector<32x128xf32>
    %cst = arith.constant dense<0.000000e+00> : vector<8x128xf32>
    %2 = tpu.matmul %0, %1, %cst {dimension_numbers = #tpu.dot_dimension_numbers<[1], [0], [0], [1], [0, 0, 1, 1], [], []>} : vector<8x32xf32>, vector<32x128xf32>, vector<8x128xf32> -> vector<8x128xf32>
    %c0_3 = arith.constant 0 : index
    %c0_4 = arith.constant 0 : index
    %3 = vector.load %arg3[%c0_3, %c0_4] : memref<1x128xf32, #tpu.memory_space<vmem>>, vector<1x128xf32>
    %4 = vector.broadcast %3 : vector<1x128xf32> to vector<8x128xf32>
    %5 = arith.addf %2, %4 : vector<8x128xf32>
    %c0_5 = arith.constant 0 : index
    %c0_6 = arith.constant 0 : index
    %6 = vector.load %arg4[%c0_5, %c0_6] : memref<8x128xf32, #tpu.memory_space<vmem>>, vector<8x128xf32>
    tpu.vector_store %arg4[%c0_5, %c0_6], %5 {strides = array<i32>} : memref<8x128xf32, #tpu.memory_space<vmem>>, vector<8x128xf32>,
    return
  }
  func.func @transform_0(%arg0: i32) -> (i32, i32) {
    %c0_i32 = arith.constant 0 : i32
    %c0_i32_0 = arith.constant 0 : i32
    return %arg0, %c0_i32 : i32, i32
  }
  func.func @transform_1(%arg0: i32) -> (i32, i32) {
    %c0_i32 = arith.constant 0 : i32
    %c0_i32_0 = arith.constant 0 : i32
    %c0_i32_1 = arith.constant 0 : i32
    return %c0_i32, %c0_i32_0 : i32, i32
  }
  func.func @transform_2(%arg0: i32) -> (i32, i32) {
    %c0_i32 = arith.constant 0 : i32
    %c0_i32_0 = arith.constant 0 : i32
    %c0_i32_1 = arith.constant 0 : i32
    return %c0_i32, %c0_i32_0 : i32, i32
  }
  func.func @transform_3(%arg0: i32) -> (i32, i32) {
    %c0_i32 = arith.constant 0 : i32
    %c0_i32_0 = arith.constant 0 : i32
    return %arg0, %c0_i32 : i32, i32
  }
}

module attributes {stable_mosaic.version = 11 : i64} {
  func.func @_linear_kernel(%arg0: i32, %arg1: memref<8x32xf32, #tpu.memory_space<vmem>>, %arg2: memref<32x128xf32, #tpu.memory_space<vmem>>, %arg3: memref<1x128xf32, #tpu.memory_space<vmem>>, %arg4: memref<8x128xf32, #tpu.memory_space<vmem>>) attributes {dimension_semantics = [#tpu.dimension_semantics<parallel>], iteration_bounds = array<i64: 1>, scalar_prefetch = 0 : i64, scratch_operands = 0 : i64, tpu.core_type = #tpu.core_type<tc>, window_params = [{transform_indices = @transform_0, window_bounds = array<i64: 8, 32>}, {pipeline_mode = #tpu.pipeline_mode<synchronous>, transform_indices = @transform_1, window_bounds = array<i64: 32, 128>}, {pipeline_mode = #tpu.pipeline_mode<synchronous>, transform_indices = @transform_2, window_bounds = array<i64: 1, 128>}, {transform_indices = @transform_3, window_bounds = array<i64: 8, 128>}]} {
    %c0 = arith.constant 0 : index
    %c0_0 = arith.constant 0 : index
    %0 = vector.load %arg1[%c0, %c0_0] : memref<8x32xf32, #tpu.memory_space<vmem>>, vector<8x32xf32>
    %c0_1 = arith.constant 0 : index
    %c0_2 = arith.constant 0 : index
    %1 = vector.load %arg2[%c0_1, %c0_2] : memref<32x128xf32, #tpu.memory_space<vmem>>, vector<32x128xf32>
    %cst = arith.constant dense<0.000000e+00> : vector<8x128xf32>
    %2 = tpu.matmul %0, %1, %cst {dimension_numbers = #tpu.dot_dimension_numbers<[1], [0], [0], [1], [0, 0, 1, 1], [], []>} : vector<8x32xf32>, vector<32x128xf32>, vector<8x128xf32> -> vector<8x128xf32>
    %c0_3 = arith.constant 0 : index
    %c0_4 = arith.constant 0 : index
    %3 = vector.load %arg3[%c0_3, %c0_4] : memref<1x128xf32, #tpu.memory_space<vmem>>, vector<1x128xf32>
    %4 = vector.broadcast %3 : vector<1x128xf32> to vector<8x128xf32>
    %5 = arith.addf %2, %4 : vector<8x128xf32>
    %c0_5 = arith.constant 0 : index
    %c0_6 = arith.constant 0 : index
    %6 = vector.load %arg4[%c0_5, %c0_6] : memref<8x128xf32, #tpu.memory_space<vmem>>, vector<8x128xf32>
    tpu.vector_store %arg4[%c0_5, %c0_6], %5 {strides = array<i32>} : memref<8x128xf32, #tpu.memory_space<vmem>>, vector<8x128xf32>,
    return
  }
  func.func @transform_0(%arg0: i32) -> (i32, i32) {
    %c0_i32 = arith.constant 0 : i32
    %c0_i32_0 = arith.constant 0 : i32
    return %arg0, %c0_i32 : i32, i32
  }
  func.func @transform_1(%arg0: i32) -> (i32, i32) {
    %c0_i32 = arith.constant 0 : i32
    %c0_i32_0 = arith.constant 0 : i32
    %c0_i32_1 = arith.constant 0 : i32
    return %c0_i32, %c0_i32_0 : i32, i32
  }
  func.func @transform_2(%arg0: i32) -> (i32, i32) {
    %c0_i32 = arith.constant 0 : i32
    %c0_i32_0 = arith.constant 0 : i32
    %c0_i32_1 = arith.constant 0 : i32
    return %c0_i32, %c0_i32_0 : i32, i32
  }
  func.func @transform_3(%arg0: i32) -> (i32, i32) {
    %c0_i32 = arith.constant 0 : i32
    %c0_i32_0 = arith.constant 0 : i32
    return %arg0, %c0_i32 : i32, i32
  }
}

</mosaic_0001>

<llo_original>
// kernel: tpu_custom_call.1
$region0: #{tpu_custom_call.1}
  #allocation0 [shape = 'u32[]', space=smem, size = 0x4, offset = 0x4, fixed_abs, tag = 'smem constant byte address 0x4 - core index']
  #allocation1 [shape = 'u32[72,128]{1,0:T(1,128)}', space=vmem, size = 0x9000, scoped, tag = 'internal scratch']
  %s0 = inlined_call_operand.hbm [shape: f32[8,32], index: 0, kind: input, shape index: {}]
  %s1 = inlined_call_operand.hbm [shape: f32[32,128], index: 1, kind: input, shape index: {}]
  %s2 = inlined_call_operand.vmem [shape: f32[1,128], index: 2, kind: input, shape index: {}]
  %s3 = inlined_call_operand.hbm [shape: f32[8,128], index: 3, kind: output, shape index: {}]
  %s4 = sld [smem:[#allocation0]]
  $region30: #{tpu_custom_call.1} parent=0
    _
  %s6 = ssub.s32 1, %s4
  %s7 = scalar_select 0, %s6, %s4
  $region1: #{tpu_custom_call.1} parent=0
    #allocation2 [shape = 'u8[4096]{0}', space=vmem, size = 0x1000, scoped, tag = 'input window, operand 0, single buffered']
    #allocation3 [shape = 's32[1]{0}', space=sflag, size = 0x4, scoped, tag = 'scoped memory for tpu_custom_call.1']
    #allocation4 [shape = 's32[1]{0}', space=sflag, size = 0x4, scoped, tag = 'scoped memory for tpu_custom_call.1']
    #allocation5 [shape = 'u8[16384]{0}', space=vmem, size = 0x4000, scoped, tag = 'input window, operand 1, single buffered']
    #allocation6 [shape = 's32[1]{0}', space=sflag, size = 0x4, scoped, tag = 'scoped memory for tpu_custom_call.1']
    #allocation7 [shape = 'u8[4096]{0}', space=vmem, size = 0x1000, scoped, tag = 'output window, operand 0, single buffered']
    %8 = vsyncpa [#allocation3], 0
    %9 = vsyncpa [#allocation6], 0
    %10 = vsyncpa [#allocation4], 0
    // Predicated region
    $region2: #{tpu_custom_call.1} parent=1 // pred_check
      _
    $region3: #{tpu_custom_call.1} parent=1 // pred_check_branch
      %12 = sbr.rel (0) target = $region5
    $region4: #{tpu_custom_call.1} parent=1 // pred_region
      %14 = vsyncadd [#allocation3], 0
      %s16 = sshll.u32 %s0, 4
      %s17 = int_to_ptr.hbm [resolvable:$true] %s16
      %s18 = sshll.u32 [#allocation2], 4
      %s19 = int_to_ptr.vmem [resolvable:$true] %s18
      %21 = dma.hbm_to_vmem [thread:$0]  %s17, 128, %s19, [#allocation3]
    $region5: #{tpu_custom_call.1} parent=1 // pred_fallthru
      _
    // Predicated region
    $region6: #{tpu_custom_call.1} parent=1 // pred_check
      _
    $region7: #{tpu_custom_call.1} parent=1 // pred_check_branch
      %23 = sbr.rel (0) target = $region9
    $region8: #{tpu_custom_call.1} parent=1 // pred_region
      %25 = vsyncadd [#allocation6], 0
      %s26 = sshll.u32 %s1, 4
      %s27 = int_to_ptr.hbm [resolvable:$true] %s26
      %s28 = sshll.u32 [#allocation5], 4
      %s29 = int_to_ptr.vmem [resolvable:$true] %s28
      %34 = dma.hbm_to_vmem [thread:$0]  %s27, 512, %s29, [#allocation6], 128, 128, 8
    $region9: #{tpu_custom_call.1} parent=1 // pred_fallthru
      _
    // Predicated region
    $region10: #{tpu_custom_call.1} parent=1 // pred_check
      _
    $region11: #{tpu_custom_call.1} parent=1 // pred_check_branch
      %36 = sbr.rel (0) target = $region13
    $region12: #{tpu_custom_call.1} parent=1 // pred_region
      _
    $region13: #{tpu_custom_call.1} parent=1 // pred_fallthru
      _
    // Predicated region
    $region14: #{tpu_custom_call.1} parent=1 // pred_check
      _
    $region15: #{tpu_custom_call.1} parent=1 // pred_check_branch
      %38 = sbr.rel (0) target = $region17
    $region16: #{tpu_custom_call.1} parent=1 // pred_region
      %40 = dma.done [#allocation3], 128
    $region17: #{tpu_custom_call.1} parent=1 // pred_fallthru
      _
    // Predicated region
    $region18: #{tpu_custom_call.1} parent=1 // pred_check
      _
    $region19: #{tpu_custom_call.1} parent=1 // pred_check_branch
      %42 = sbr.rel (0) target = $region21
    $region20: #{tpu_custom_call.1} parent=1 // pred_region
      %44 = dma.done [#allocation6], 512
    $region21: #{tpu_custom_call.1} parent=1 // pred_fallthru
      _
    %v45 = vld [vmem:[#allocation2] sm:$0xff]
    %v46 = vld [vmem:[#allocation5] sm:$0xff]
    %v47 = vld [vmem:[#allocation5 + $0x8] sm:$0xff]
    %v48 = vld [vmem:[#allocation5 + $0x10] sm:$0xff]
    %v49 = vld [vmem:[#allocation5 + $0x18] sm:$0xff]
    %v50 = vld [vmem:[%s2] sm:$0x1]
    %v52 = vperm.slane %v50, 0
    %vm54 = vcmask 261120
    %v56 = vsel %vm54, %v45, 0
    %58 = vmatpush.msra.mxu0 0.0
    %59 = vmatpush.msra.mxu0 0.0
    %60 = vmatpush.msra.mxu0 0.0
    %61 = vmatpush.msra.mxu0 0.0
    %62 = vmatpush.msra.mxu0 0.0
    %63 = vmatpush.msra.mxu0 0.0
    %64 = vmatpush.msra.mxu0 0.0
    %65 = vmatpush.msra.mxu0 0.0
    %66 = vmatpush.msra.mxu0 0.0
    %67 = vmatpush.msra.mxu0 0.0
    %68 = vmatpush.msra.mxu0 0.0
    %69 = vmatpush.msra.mxu0 0.0
    %70 = vmatpush.msra.mxu0 %v49
    %71 = vmatpush.msra.mxu0 %v48
    %72 = vmatpush.msra.mxu0 %v47
    %73 = vmatpush.msra.mxu0 %v46
    %74 = vmatmul.f32.gmra.mxu0 %v56
    %v75 = vpop.f32.mrf.mxu0
    %v76 = vadd.f32 %v52, %v75
    %77 = vdwg.mxu0
    %78 = vst [vmem:[#allocation7] sm:$0xff] %v76
    // Predicated region
    $region22: #{tpu_custom_call.1} parent=1 // pred_check
      _
    $region23: #{tpu_custom_call.1} parent=1 // pred_check_branch
      %80 = sbr.rel (0) target = $region25
    $region24: #{tpu_custom_call.1} parent=1 // pred_region
      %82 = vsyncadd [#allocation4], 0
      %s84 = sshll.u32 [#allocation7], 4
      %s85 = int_to_ptr.vmem [resolvable:$true] %s84
      %s86 = sshll.u32 %s3, 4
      %s87 = int_to_ptr.hbm [resolvable:$true] %s86
      %89 = dma.vmem_to_hbm [thread:$0]  %s85, 128, %s87, [#allocation4]
    $region25: #{tpu_custom_call.1} parent=1 // pred_fallthru
      _
    // Predicated region
    $region26: #{tpu_custom_call.1} parent=1 // pred_check
      _
    $region27: #{tpu_custom_call.1} parent=1 // pred_check_branch
      %91 = sbr.rel (0) target = $region29
    $region28: #{tpu_custom_call.1} parent=1 // pred_region
      %93 = dma.done [#allocation4], 128
    $region29: #{tpu_custom_call.1} parent=1 // pred_fallthru
      _
    %94 = vsyncpa [#allocation3], 1
    %95 = vsyncpa [#allocation6], 1
    %96 = vsyncpa [#allocation4], 1

// kernel: tpu_custom_call.1
$region0: #{tpu_custom_call.1}
  #allocation0 [shape = 'u32[]', space=smem, size = 0x4, offset = 0x4, fixed_abs, tag = 'smem constant byte address 0x4 - core index']
  #allocation1 [shape = 'u32[72,128]{1,0:T(1,128)}', space=vmem, size = 0x9000, scoped, tag = 'internal scratch']
  %s0 = inlined_call_operand.hbm [shape: f32[8,32], index: 0, kind: input, shape index: {}]
  %s1 = inlined_call_operand.hbm [shape: f32[32,128], index: 1, kind: input, shape index: {}]
  %s2 = inlined_call_operand.vmem [shape: f32[1,128], index: 2, kind: input, shape index: {}]
  %s3 = inlined_call_operand.hbm [shape: f32[8,128], index: 3, kind: output, shape index: {}]
  %s4 = sld [smem:[#allocation0]]
  $region30: #{tpu_custom_call.1} parent=0
    _
  %s6 = ssub.s32 1, %s4
  %s7 = scalar_select 0, %s6, %s4
  $region1: #{tpu_custom_call.1} parent=0
    #allocation2 [shape = 'u8[4096]{0}', space=vmem, size = 0x1000, scoped, tag = 'input window, operand 0, single buffered']
    #allocation3 [shape = 's32[1]{0}', space=sflag, size = 0x4, scoped, tag = 'scoped memory for tpu_custom_call.1']
    #allocation4 [shape = 's32[1]{0}', space=sflag, size = 0x4, scoped, tag = 'scoped memory for tpu_custom_call.1']
    #allocation5 [shape = 'u8[16384]{0}', space=vmem, size = 0x4000, scoped, tag = 'input window, operand 1, single buffered']
    #allocation6 [shape = 's32[1]{0}', space=sflag, size = 0x4, scoped, tag = 'scoped memory for tpu_custom_call.1']
    #allocation7 [shape = 'u8[4096]{0}', space=vmem, size = 0x1000, scoped, tag = 'output window, operand 0, single buffered']
    %8 = vsyncpa [#allocation3], 0
    %9 = vsyncpa [#allocation6], 0
    %10 = vsyncpa [#allocation4], 0
    // Predicated region
    $region2: #{tpu_custom_call.1} parent=1 // pred_check
      _
    $region3: #{tpu_custom_call.1} parent=1 // pred_check_branch
      %12 = sbr.rel (0) target = $region5
    $region4: #{tpu_custom_call.1} parent=1 // pred_region
      %14 = vsyncadd [#allocation3], 0
      %s16 = sshll.u32 %s0, 4
      %s17 = int_to_ptr.hbm [resolvable:$true] %s16
      %s18 = sshll.u32 [#allocation2], 4
      %s19 = int_to_ptr.vmem [resolvable:$true] %s18
      %21 = dma.hbm_to_vmem [thread:$0]  %s17, 128, %s19, [#allocation3]
    $region5: #{tpu_custom_call.1} parent=1 // pred_fallthru
      _
    // Predicated region
    $region6: #{tpu_custom_call.1} parent=1 // pred_check
      _
    $region7: #{tpu_custom_call.1} parent=1 // pred_check_branch
      %23 = sbr.rel (0) target = $region9
    $region8: #{tpu_custom_call.1} parent=1 // pred_region
      %25 = vsyncadd [#allocation6], 0
      %s26 = sshll.u32 %s1, 4
      %s27 = int_to_ptr.hbm [resolvable:$true] %s26
      %s28 = sshll.u32 [#allocation5], 4
      %s29 = int_to_ptr.vmem [resolvable:$true] %s28
      %34 = dma.hbm_to_vmem [thread:$0]  %s27, 512, %s29, [#allocation6], 128, 128, 8
    $region9: #{tpu_custom_call.1} parent=1 // pred_fallthru
      _
    // Predicated region
    $region10: #{tpu_custom_call.1} parent=1 // pred_check
      _
    $region11: #{tpu_custom_call.1} parent=1 // pred_check_branch
      %36 = sbr.rel (0) target = $region13
    $region12: #{tpu_custom_call.1} parent=1 // pred_region
      _
    $region13: #{tpu_custom_call.1} parent=1 // pred_fallthru
      _
    // Predicated region
    $region14: #{tpu_custom_call.1} parent=1 // pred_check
      _
    $region15: #{tpu_custom_call.1} parent=1 // pred_check_branch
      %38 = sbr.rel (0) target = $region17
    $region16: #{tpu_custom_call.1} parent=1 // pred_region
      %40 = dma.done [#allocation3], 128
    $region17: #{tpu_custom_call.1} parent=1 // pred_fallthru
      _
    // Predicated region
    $region18: #{tpu_custom_call.1} parent=1 // pred_check
      _
    $region19: #{tpu_custom_call.1} parent=1 // pred_check_branch
      %42 = sbr.rel (0) target = $region21
    $region20: #{tpu_custom_call.1} parent=1 // pred_region
      %44 = dma.done [#allocation6], 512
    $region21: #{tpu_custom_call.1} parent=1 // pred_fallthru
      _
    %v45 = vld [vmem:[#allocation2] sm:$0xff]
    %v46 = vld [vmem:[#allocation5] sm:$0xff]
    %v47 = vld [vmem:[#allocation5 + $0x8] sm:$0xff]
    %v48 = vld [vmem:[#allocation5 + $0x10] sm:$0xff]
    %v49 = vld [vmem:[#allocation5 + $0x18] sm:$0xff]
    %v50 = vld [vmem:[%s2] sm:$0x1]
    %v52 = vperm.slane %v50, 0
    %vm54 = vcmask 261120
    %v56 = vsel %vm54, %v45, 0
    %58 = vmatpush.msra.mxu0 0.0
    %59 = vmatpush.msra.mxu0 0.0
    %60 = vmatpush.msra.mxu0 0.0
    %61 = vmatpush.msra.mxu0 0.0
    %62 = vmatpush.msra.mxu0 0.0
    %63 = vmatpush.msra.mxu0 0.0
    %64 = vmatpush.msra.mxu0 0.0
    %65 = vmatpush.msra.mxu0 0.0
    %66 = vmatpush.msra.mxu0 0.0
    %67 = vmatpush.msra.mxu0 0.0
    %68 = vmatpush.msra.mxu0 0.0
    %69 = vmatpush.msra.mxu0 0.0
    %70 = vmatpush.msra.mxu0 %v49
    %71 = vmatpush.msra.mxu0 %v48
    %72 = vmatpush.msra.mxu0 %v47
    %73 = vmatpush.msra.mxu0 %v46
    %74 = vmatmul.f32.gmra.mxu0 %v56
    %v75 = vpop.f32.mrf.mxu0
    %v76 = vadd.f32 %v52, %v75
    %77 = vdwg.mxu0
    %78 = vst [vmem:[#allocation7] sm:$0xff] %v76
    // Predicated region
    $region22: #{tpu_custom_call.1} parent=1 // pred_check
      _
    $region23: #{tpu_custom_call.1} parent=1 // pred_check_branch
      %80 = sbr.rel (0) target = $region25
    $region24: #{tpu_custom_call.1} parent=1 // pred_region
      %82 = vsyncadd [#allocation4], 0
      %s84 = sshll.u32 [#allocation7], 4
      %s85 = int_to_ptr.vmem [resolvable:$true] %s84
      %s86 = sshll.u32 %s3, 4
      %s87 = int_to_ptr.hbm [resolvable:$true] %s86
      %89 = dma.vmem_to_hbm [thread:$0]  %s85, 128, %s87, [#allocation4]
    $region25: #{tpu_custom_call.1} parent=1 // pred_fallthru
      _
    // Predicated region
    $region26: #{tpu_custom_call.1} parent=1 // pred_check
      _
    $region27: #{tpu_custom_call.1} parent=1 // pred_check_branch
      %91 = sbr.rel (0) target = $region29
    $region28: #{tpu_custom_call.1} parent=1 // pred_region
      %93 = dma.done [#allocation4], 128
    $region29: #{tpu_custom_call.1} parent=1 // pred_fallthru
      _
    %94 = vsyncpa [#allocation3], 1
    %95 = vsyncpa [#allocation6], 1
    %96 = vsyncpa [#allocation4], 1

</llo_original>
